<compile_context>
chip_gen: v7x
topology: tpu7x:2x2x1
jax: 0.10.0
libtpu: 0.0.40
codegen_flags: <defaults>
</compile_context>

<pallas_src>
import jax
import jax.numpy as jnp
from jax.experimental import pallas as pl
from jax.experimental.pallas import tpu as pltpu


def _round_up(x, m):
    return (x + m - 1) // m * m


def _vmem_limit_bytes():
    # v5e/v6e: 128 MiB VMEM per core, v7x: 64 MiB. Never request all of physical
    # VMEM -- leave headroom for double buffering and compiler scratch.
    try:
        cap = pltpu.get_tpu_info().vmem_capacity_bytes
    except Exception:
        cap = 128 << 20
    return int(min(64 << 20, cap * 3 // 4))


def _pick_tm(M, K_p, Cout_p, in_bytes, vmem_limit):
    # Largest power-of-two row tile whose double-buffered tiles + resident
    # weights fit comfortably under the VMEM request.
    budget = vmem_limit // 2
    tm = 2048
    while tm > 128:
        need = (2 * tm * K_p * in_bytes        # double-buffered patches tile
                + 2 * tm * Cout_p * 4          # double-buffered f32 output tile
                + K_p * Cout_p * in_bytes)     # grid-invariant weights
        if need <= budget:
            break
        tm //= 2
    return max(128, min(tm, _round_up(M, 128)))


def _conv_bn_relu_kernel(patches_ref, w_ref, bias_ref, o_ref):
    # Hot path: MXU matmul (BN scale pre-folded into W) + bias + ReLU, fused.
    acc = jnp.dot(patches_ref[...], w_ref[...],
                  preferred_element_type=jnp.float32)           # (TM, Cout_p) f32
    y = acc + bias_ref[...]                                     # broadcast (1, Cout_p)
    o_ref[...] = jnp.maximum(y, 0.0).astype(o_ref.dtype)


def basic_conv2d(x_nchw, weight, gamma, beta, running_mean, running_var,
                 *, stride=1, padding=1, eps=1e-3,
                 compute_dtype=jnp.float32):
    """Forward of BasicConv2d.

    x_nchw:  (N, Cin, H, W)
    weight:  (Cout, Cin, KH, KW)   (PyTorch Conv2d layout, bias=False)
    BN params/stats: (Cout,)
    compute_dtype: dtype of the matmul operands (use jnp.bfloat16 on v6e/v7x
                   to halve HBM traffic; accumulation stays f32).
    Returns: (N, Cout, Ho, Wo) float32
    """
    N, Cin, H, W = x_nchw.shape
    Cout, _, KH, KW = weight.shape

    # ---- glue: im2col in NHWC (plain XLA) ----
    x = jnp.transpose(x_nchw, (0, 2, 3, 1)).astype(jnp.float32)     # (N, H, W, Cin)
    x = jnp.pad(x, ((0, 0), (padding, padding), (padding, padding), (0, 0)))
    Ho = (H + 2 * padding - KH) // stride + 1
    Wo = (W + 2 * padding - KW) // stride + 1

    # TODO(synk): replace this explicit im2col (KH*KW x input bytes in HBM) with
    # an in-kernel tap-reduction grid axis (stream (TM, Cin) slabs per tap into a
    # VMEM f32 accumulator) to cut HBM read traffic ~KH*KW x.
    cols = []
    for kh in range(KH):
        for kw in range(KW):
            cols.append(x[:, kh:kh + stride * Ho:stride,
                          kw:kw + stride * Wo:stride, :])           # (N, Ho, Wo, Cin)
    patches = jnp.concatenate(cols, axis=-1)                        # (N, Ho, Wo, K)

    M = N * Ho * Wo
    K = KH * KW * Cin
    patches = patches.reshape(M, K)

    # ---- TPU-friendly padding: K -> multiple of 8 sublanes, Cout -> 128 lanes ----
    K_p = _round_up(K, 8)
    Cout_p = _round_up(Cout, 128)
    in_bytes = jnp.dtype(compute_dtype).itemsize
    vmem_limit = _vmem_limit_bytes()
    TM = _pick_tm(M, K_p, Cout_p, in_bytes, vmem_limit)
    M_p = _round_up(M, TM)

    patches = jnp.pad(patches, ((0, M_p - M), (0, K_p - K))).astype(compute_dtype)

    # Weight -> (kh, kw, cin) x Cout, BN scale folded in, zero padded.
    scale = gamma.astype(jnp.float32) / jnp.sqrt(running_var.astype(jnp.float32) + eps)
    bias = beta.astype(jnp.float32) - running_mean.astype(jnp.float32) * scale
    w2d = jnp.transpose(weight, (2, 3, 1, 0)).reshape(K, Cout).astype(jnp.float32)
    w2d = w2d * scale[None, :]
    w2d = jnp.pad(w2d, ((0, K_p - K), (0, Cout_p - Cout))).astype(compute_dtype)
    bias_p = jnp.pad(bias, (0, Cout_p - Cout)).reshape(1, Cout_p)   # f32 epilogue

    # ---- fused Pallas kernel: grid over M, double-buffered patch stream ----
    out2d = pl.pallas_call(
        _conv_bn_relu_kernel,
        out_shape=jax.ShapeDtypeStruct((M_p, Cout_p), jnp.float32),
        grid_spec=pltpu.PrefetchScalarGridSpec(
            num_scalar_prefetch=0,
            grid=(M_p // TM,),
            in_specs=[
                pl.BlockSpec((TM, K_p), lambda i: (i, 0)),        # streamed patches
                pl.BlockSpec((K_p, Cout_p), lambda i: (0, 0)),    # grid-invariant W
                pl.BlockSpec((1, Cout_p), lambda i: (0, 0)),      # grid-invariant bias
            ],
            out_specs=pl.BlockSpec((TM, Cout_p), lambda i: (i, 0)),
        ),
        compiler_params=pltpu.CompilerParams(
            dimension_semantics=("parallel",),   # v7x: shard M tiles over 2 TCs
            vmem_limit_bytes=vmem_limit,
        ),
    )(patches, w2d, bias_p)

    out = out2d[:M, :Cout].reshape(N, Ho, Wo, Cout)
    return jnp.transpose(out, (0, 3, 1, 2))                         # back to NCHW


def _reference(x, weight, gamma, beta, running_mean, running_var,
               *, stride=1, padding=1, eps=1e-3):
    y = jax.lax.conv_general_dilated(
        x.astype(jnp.float32), weight.astype(jnp.float32),
        window_strides=(stride, stride),
        padding=((padding, padding), (padding, padding)),
        dimension_numbers=("NCHW", "OIHW", "NCHW"))
    s = (gamma / jnp.sqrt(running_var + eps)).reshape(1, -1, 1, 1)
    b = (beta - running_mean * gamma / jnp.sqrt(running_var + eps)).reshape(1, -1, 1, 1)
    return jnp.maximum(y * s + b, 0.0)


if __name__ == "__main__":
    key = jax.random.PRNGKey(0)
    k1, k2, k3, k4 = jax.random.split(key, 4)

    N, Cin, H, W = 2, 4, 16, 16
    Cout, KH, KW = 8, 3, 3            # kernel_size=3, stride=1, padding=1

    x = jax.random.normal(k1, (N, Cin, H, W), dtype=jnp.float32)
    weight = jax.random.normal(k2, (Cout, Cin, KH, KW), dtype=jnp.float32) * 0.1
    gamma = jnp.ones((Cout,), jnp.float32)
    beta = jnp.zeros((Cout,), jnp.float32)
    running_mean = jax.random.normal(k3, (Cout,), dtype=jnp.float32) * 0.05
    running_var = jnp.abs(jax.random.normal(k4, (Cout,), dtype=jnp.float32)) * 0.1 + 1.0

    ref = _reference(x, weight, gamma, beta, running_mean, running_var,
                     stride=1, padding=1, eps=1e-3)

    # f32 matmul operands: tight check vs reference.
    out = basic_conv2d(x, weight, gamma, beta, running_mean, running_var,
                       stride=1, padding=1, eps=1e-3,
                       compute_dtype=jnp.float32)
    out = jax.block_until_ready(out)
    assert out.shape == (N, Cout, H, W)
    assert jnp.allclose(out, ref, atol=1e-4, rtol=1e-4), "f32 mismatch vs reference"

    # bf16 matmul operands (v6e/v7x fast path), f32 accumulate + epilogue: loose check.
    out_bf16 = basic_conv2d(x, weight, gamma, beta, running_mean, running_var,
                            stride=1, padding=1, eps=1e-3,
                            compute_dtype=jnp.bfloat16)
    out_bf16 = jax.block_until_ready(out_bf16)
    assert jnp.allclose(out_bf16, ref, atol=5e-2, rtol=5e-2), "bf16 mismatch vs reference"

    print("KERNEL_OK")
</pallas_src>

<mosaic_0001>
module attributes {stable_mosaic.version = 11 : i64} {
  func.func @_conv_bn_relu_kernel(%arg0: i32, %arg1: memref<512x40xf32, #tpu.memory_space<vmem>>, %arg2: memref<40x128xf32, #tpu.memory_space<vmem>>, %arg3: memref<1x128xf32, #tpu.memory_space<vmem>>, %arg4: memref<512x128xf32, #tpu.memory_space<vmem>>) attributes {dimension_semantics = [#tpu.dimension_semantics<parallel>], iteration_bounds = array<i64: 1>, scalar_prefetch = 0 : i64, scratch_operands = 0 : i64, tpu.core_type = #tpu.core_type<tc>, window_params = [{transform_indices = @transform_0, window_bounds = array<i64: 512, 40>}, {pipeline_mode = #tpu.pipeline_mode<synchronous>, transform_indices = @transform_1, window_bounds = array<i64: 40, 128>}, {pipeline_mode = #tpu.pipeline_mode<synchronous>, transform_indices = @transform_2, window_bounds = array<i64: 1, 128>}, {transform_indices = @transform_3, window_bounds = array<i64: 512, 128>}]} {
    %c0 = arith.constant 0 : index
    %c0_0 = arith.constant 0 : index
    %0 = vector.load %arg1[%c0, %c0_0] : memref<512x40xf32, #tpu.memory_space<vmem>>, vector<512x40xf32>
    %c0_1 = arith.constant 0 : index
    %c0_2 = arith.constant 0 : index
    %1 = vector.load %arg2[%c0_1, %c0_2] : memref<40x128xf32, #tpu.memory_space<vmem>>, vector<40x128xf32>
    %cst = arith.constant dense<0.000000e+00> : vector<512x128xf32>
    %2 = tpu.matmul %0, %1, %cst {dimension_numbers = #tpu.dot_dimension_numbers<[1], [0], [0], [1], [0, 0, 1, 1], [], []>} : vector<512x40xf32>, vector<40x128xf32>, vector<512x128xf32> -> vector<512x128xf32>
    %c0_3 = arith.constant 0 : index
    %c0_4 = arith.constant 0 : index
    %3 = vector.load %arg3[%c0_3, %c0_4] : memref<1x128xf32, #tpu.memory_space<vmem>>, vector<1x128xf32>
    %4 = vector.broadcast %3 : vector<1x128xf32> to vector<512x128xf32>
    %5 = arith.addf %2, %4 : vector<512x128xf32>
    %cst_5 = arith.constant 0.000000e+00 : f32
    %6 = vector.broadcast %cst_5 : f32 to vector<512x128xf32>
    %7 = arith.maximumf %5, %6 : vector<512x128xf32>
    %c0_6 = arith.constant 0 : index
    %c0_7 = arith.constant 0 : index
    %8 = vector.load %arg4[%c0_6, %c0_7] : memref<512x128xf32, #tpu.memory_space<vmem>>, vector<512x128xf32>
    tpu.vector_store %arg4[%c0_6, %c0_7], %7 {strides = array<i32>} : memref<512x128xf32, #tpu.memory_space<vmem>>, vector<512x128xf32>,
    return
  }
  func.func @transform_0(%arg0: i32) -> (i32, i32) {
    %c0_i32 = arith.constant 0 : i32
    %c0_i32_0 = arith.constant 0 : i32
    return %arg0, %c0_i32 : i32, i32
  }
  func.func @transform_1(%arg0: i32) -> (i32, i32) {
    %c0_i32 = arith.constant 0 : i32
    %c0_i32_0 = arith.constant 0 : i32
    %c0_i32_1 = arith.constant 0 : i32
    return %c0_i32, %c0_i32_0 : i32, i32
  }
  func.func @transform_2(%arg0: i32) -> (i32, i32) {
    %c0_i32 = arith.constant 0 : i32
    %c0_i32_0 = arith.constant 0 : i32
    %c0_i32_1 = arith.constant 0 : i32
    return %c0_i32, %c0_i32_0 : i32, i32
  }
  func.func @transform_3(%arg0: i32) -> (i32, i32) {
    %c0_i32 = arith.constant 0 : i32
    %c0_i32_0 = arith.constant 0 : i32
    return %arg0, %c0_i32 : i32, i32
  }
}

</mosaic_0001>

<llo_original>
// kernel: tpu_custom_call.1
$region0: #{tpu_custom_call.1}
  #allocation0 [shape = 'u32[]', space=smem, size = 0x4, offset = 0x4, fixed_abs, tag = 'smem constant byte address 0x4 - core index']
  #allocation1 [shape = 'u32[144,128]{1,0:T(1,128)}', space=vmem, size = 0x12000, scoped, tag = 'internal scratch']
  %s0 = inlined_call_operand.hbm [shape: f32[512,40], index: 0, kind: input, shape index: {}]
  %s1 = inlined_call_operand.hbm [shape: f32[40,128], index: 1, kind: input, shape index: {}]
  %s2 = inlined_call_operand.hbm [shape: f32[1,128], index: 2, kind: input, shape index: {}]
  %s3 = inlined_call_operand.hbm [shape: f32[512,128], index: 3, kind: output, shape index: {}]
  %s4 = sld [smem:[#allocation0]]
  $region34: #{tpu_custom_call.1} parent=0
    _
  %s6 = ssub.s32 1, %s4
  %s7 = scalar_select 0, %s6, %s4
  $region1: #{tpu_custom_call.1} parent=0
    #allocation2 [shape = 'u8[262144]{0}', space=vmem, size = 0x40000, scoped, tag = 'input window, operand 0, single buffered']
    #allocation3 [shape = 's32[1]{0}', space=sflag, size = 0x4, scoped, tag = 'scoped memory for tpu_custom_call.1']
    #allocation4 [shape = 's32[1]{0}', space=sflag, size = 0x4, scoped, tag = 'scoped memory for tpu_custom_call.1']
    #allocation5 [shape = 'u8[20480]{0}', space=vmem, size = 0x5000, scoped, tag = 'input window, operand 1, single buffered']
    #allocation6 [shape = 's32[1]{0}', space=sflag, size = 0x4, scoped, tag = 'scoped memory for tpu_custom_call.1']
    #allocation7 [shape = 'u8[512]{0}', space=vmem, size = 0x400, scoped, tag = 'input window, operand 2, single buffered']
    #allocation8 [shape = 'u8[262144]{0}', space=vmem, size = 0x40000, scoped, tag = 'output window, operand 0, single buffered']
    %8 = vsyncpa [#allocation3], 0
    %9 = vsyncpa [#allocation6], 0
    %10 = vsyncpa [#allocation4], 0
    // Predicated region
    $region2: #{tpu_custom_call.1} parent=1 // pred_check
      _
    $region3: #{tpu_custom_call.1} parent=1 // pred_check_branch
      %12 = sbr.rel (0) target = $region5
    $region4: #{tpu_custom_call.1} parent=1 // pred_region
      %s14 = ssub.s32 8192, 8192
      %15 = vsyncadd [#allocation3], %s14
      %s16 = sshll.u32 [#allocation2], 4
      %s17 = int_to_ptr.vmem [resolvable:$true] %s16
      %22 = dma.hbm_to_vmem [thread:$0]  %s0, 8192, %s17, [#allocation3], 128, 128, 8
    $region5: #{tpu_custom_call.1} parent=1 // pred_fallthru
      _
    // Predicated region
    $region6: #{tpu_custom_call.1} parent=1 // pred_check
      _
    $region7: #{tpu_custom_call.1} parent=1 // pred_check_branch
      %24 = sbr.rel (0) target = $region9
    $region8: #{tpu_custom_call.1} parent=1 // pred_region
      %s26 = ssub.s32 640, 640
      %27 = vsyncadd [#allocation6], %s26
      %s28 = sshll.u32 [#allocation5], 4
      %s29 = int_to_ptr.vmem [resolvable:$true] %s28
      %34 = dma.hbm_to_vmem [thread:$0]  %s1, 640, %s29, [#allocation6], 128, 128, 8
    $region9: #{tpu_custom_call.1} parent=1 // pred_fallthru
      _
    // Predicated region
    $region10: #{tpu_custom_call.1} parent=1 // pred_check
      _
    $region11: #{tpu_custom_call.1} parent=1 // pred_check_branch
      %36 = sbr.rel (0) target = $region13
    $region12: #{tpu_custom_call.1} parent=1 // pred_region
      %s38 = ssub.s32 16, 16
      %39 = vsyncadd [#allocation6], %s38
      %s41 = sshll.u32 [#allocation7], 4
      %s42 = int_to_ptr.vmem [resolvable:$true] %s41
      %44 = dma.hbm_to_vmem [thread:$0]  %s2, 16, %s42, [#allocation6]
    $region13: #{tpu_custom_call.1} parent=1 // pred_fallthru
      _
    // Predicated region
    $region14: #{tpu_custom_call.1} parent=1 // pred_check
      _
    $region15: #{tpu_custom_call.1} parent=1 // pred_check_branch
      %46 = sbr.rel (0) target = $region17
    $region16: #{tpu_custom_call.1} parent=1 // pred_region
      %47 = dma.done [#allocation3], 8192
    $region17: #{tpu_custom_call.1} parent=1 // pred_fallthru
      _
    // Predicated region
    $region18: #{tpu_custom_call.1} parent=1 // pred_check
      _
    $region19: #{tpu_custom_call.1} parent=1 // pred_check_branch
      %49 = sbr.rel (0) target = $region21
    $region20: #{tpu_custom_call.1} parent=1 // pred_region
      %50 = dma.done [#allocation6], 640
    $region21: #{tpu_custom_call.1} parent=1 // pred_fallthru
      _
    // Predicated region
    $region22: #{tpu_custom_call.1} parent=1 // pred_check
      _
    $region23: #{tpu_custom_call.1} parent=1 // pred_check_branch
      %52 = sbr.rel (0) target = $region25
    $region24: #{tpu_custom_call.1} parent=1 // pred_region
      %53 = dma.done [#allocation6], 16
    $region25: #{tpu_custom_call.1} parent=1 // pred_fallthru
      _
    %v54 = vld [vmem:[#allocation2] sm:$0xff]
    %v55 = vld [vmem:[#allocation2 + $0x8] sm:$0xff]
    %v56 = vld [vmem:[#allocation2 + $0x10] sm:$0xff]
    %v57 = vld [vmem:[#allocation2 + $0x18] sm:$0xff]
    %v58 = vld [vmem:[#allocation2 + $0x20] sm:$0xff]
    %v59 = vld [vmem:[#allocation2 + $0x28] sm:$0xff]
    %v60 = vld [vmem:[#allocation2 + $0x30] sm:$0xff]
    %v61 = vld [vmem:[#allocation2 + $0x38] sm:$0xff]
    %v62 = vld [vmem:[#allocation2 + $0x40] sm:$0xff]
    %v63 = vld [vmem:[#allocation2 + $0x48] sm:$0xff]
    %v64 = vld [vmem:[#allocation2 + $0x50] sm:$0xff]
    %v65 = vld [vmem:[#allocation2 + $0x58] sm:$0xff]
    %v66 = vld [vmem:[#allocation2 + $0x60] sm:$0xff]
    %v67 = vld [vmem:[#allocation2 + $0x68] sm:$0xff]
    %v68 = vld [vmem:[#allocation2 + $0x70] sm:$0xff]
    %v69 = vld [vmem:[#allocation2 + $0x78] sm:$0xff]
    %v70 = vld [vmem:[#allocation2 + $0x80] sm:$0xff]
    %v71 = vld [vmem:[#allocation2 + $0x88] sm:$0xff]
    %v72 = vld [vmem:[#allocation2 + $0x90] sm:$0xff]
    %v73 = vld [vmem:[#allocation2 + $0x98] sm:$0xff]
    %v74 = vld [vmem:[#allocation2 + $0xa0] sm:$0xff]
    %v75 = vld [vmem:[#allocation2 + $0xa8] sm:$0xff]
    %v76 = vld [vmem:[#allocation2 + $0xb0] sm:$0xff]
    %v77 = vld [vmem:[#allocation2 + $0xb8] sm:$0xff]
    %v78 = vld [vmem:[#allocation2 + $0xc0] sm:$0xff]
    %v79 = vld [vmem:[#allocation2 + $0xc8] sm:$0xff]
    %v80 = vld [vmem:[#allocation2 + $0xd0] sm:$0xff]
    %v81 = vld [vmem:[#allocation2 + $0xd8] sm:$0xff]
    %v82 = vld [vmem:[#allocation2 + $0xe0] sm:$0xff]
    %v83 = vld [vmem:[#allocation2 + $0xe8] sm:$0xff]
    %v84 = vld [vmem:[#allocation2 + $0xf0] sm:$0xff]
    %v85 = vld [vmem:[#allocation2 + $0xf8] sm:$0xff]
    %v86 = vld [vmem:[#allocation2 + $0x100] sm:$0xff]
    %v87 = vld [vmem:[#allocation2 + $0x108] sm:$0xff]
    %v88 = vld [vmem:[#allocation2 + $0x110] sm:$0xff]
    %v89 = vld [vmem:[#allocation2 + $0x118] sm:$0xff]
    %v90 = vld [vmem:[#allocation2 + $0x120] sm:$0xff]
    %v91 = vld [vmem:[#allocation2 + $0x128] sm:$0xff]
    %v92 = vld [vmem:[#allocation2 + $0x130] sm:$0xff]
    %v93 = vld [vmem:[#allocation2 + $0x138] sm:$0xff]
    %v94 = vld [vmem:[#allocation2 + $0x140] sm:$0xff]
    %v95 = vld [vmem:[#allocation2 + $0x148] sm:$0xff]
    %v96 = vld [vmem:[#allocation2 + $0x150] sm:$0xff]
    %v97 = vld [vmem:[#allocation2 + $0x158] sm:$0xff]
    %v98 = vld [vmem:[#allocation2 + $0x160] sm:$0xff]
    %v99 = vld [vmem:[#allocation2 + $0x168] sm:$0xff]
    %v100 = vld [vmem:[#allocation2 + $0x170] sm:$0xff]
    %v101 = vld [vmem:[#allocation2 + $0x178] sm:$0xff]
    %v102 = vld [vmem:[#allocation2 + $0x180] sm:$0xff]
    %v103 = vld [vmem:[#allocation2 + $0x188] sm:$0xff]
    %v104 = vld [vmem:[#allocation2 + $0x190] sm:$0xff]
    %v105 = vld [vmem:[#allocation2 + $0x198] sm:$0xff]
    %v106 = vld [vmem:[#allocation2 + $0x1a0] sm:$0xff]
    %v107 = vld [vmem:[#allocation2 + $0x1a8] sm:$0xff]
    %v108 = vld [vmem:[#allocation2 + $0x1b0] sm:$0xff]
    %v109 = vld [vmem:[#allocation2 + $0x1b8] sm:$0xff]
    %v110 = vld [vmem:[#allocation2 + $0x1c0] sm:$0xff]
    %v111 = vld [vmem:[#allocation2 + $0x1c8] sm:$0xff]
    %v112 = vld [vmem:[#allocation2 + $0x1d0] sm:$0xff]
    %v113 = vld [vmem:[#allocation2 + $0x1d8] sm:$0xff]
    %v114 = vld [vmem:[#allocation2 + $0x1e0] sm:$0xff]
    %v115 = vld [vmem:[#allocation2 + $0x1e8] sm:$0xff]
    %v116 = vld [vmem:[#allocation2 + $0x1f0] sm:$0xff]
    %v117 = vld [vmem:[#allocation2 + $0x1f8] sm:$0xff]
    %v118 = vld [vmem:[#allocation5] sm:$0xff]
    %v119 = vld [vmem:[#allocation5 + $0x8] sm:$0xff]
    %v120 = vld [vmem:[#allocation5 + $0x10] sm:$0xff]
    %v121 = vld [vmem:[#allocation5 + $0x18] sm:$0xff]
    %v122 = vld [vmem:[#allocation5 + $0x20] sm:$0xff]
    %v123 = vld [vmem:[#allocation7] sm:$0x1]
    %v125 = vlaneseq
    %v126 = vshrl.u32 %v125, 7
    %v127 = vsub.s32 0, %v126
    %v128 = vrot.slane %v123, %v127
    %vm130 = vcmask 326656
    %v132 = vsel %vm130, %v54, 0
    %v135 = vsel %vm130, %v55, 0
    %v138 = vsel %vm130, %v56, 0
    %v141 = vsel %vm130, %v57, 0
    %v144 = vsel %vm130, %v58, 0
    %v147 = vsel %vm130, %v59, 0
    %v150 = vsel %vm130, %v60, 0
    %v153 = vsel %vm130, %v61, 0
    %v156 = vsel %vm130, %v62, 0
    %v159 = vsel %vm130, %v63, 0
    %v162 = vsel %vm130, %v64, 0
    %v165 = vsel %vm130, %v65, 0
    %v168 = vsel %vm130, %v66, 0
    %v171 = vsel %vm130, %v67, 0
    %v174 = vsel %vm130, %v68, 0
    %v177 = vsel %vm130, %v69, 0
    %v180 = vsel %vm130, %v70, 0
    %v183 = vsel %vm130, %v71, 0
    %v186 = vsel %vm130, %v72, 0
    %v189 = vsel %vm130, %v73, 0
    %v192 = vsel %vm130, %v74, 0
    %v195 = vsel %vm130, %v75, 0
    %v198 = vsel %vm130, %v76, 0
    %v201 = vsel %vm130, %v77, 0
    %v204 = vsel %vm130, %v78, 0
    %v207 = vsel %vm130, %v79, 0
    %v210 = vsel %vm130, %v80, 0
    %v213 = vsel %vm130, %v81, 0
    %v216 = vsel %vm130, %v82, 0
    %v219 = vsel %vm130, %v83, 0
    %v222 = vsel %vm130, %v84, 0
    %v225 = vsel %vm130, %v85, 0
    %v228 = vsel %vm130, %v86, 0
    %v231 = vsel %vm130, %v87, 0
    %v234 = vsel %vm130, %v88, 0
    %v237 = vsel %vm130, %v89, 0
    %v240 = vsel %vm130, %v90, 0
    %v243 = vsel %vm130, %v91, 0
    %v246 = vsel %vm130, %v92, 0
    %v249 = vsel %vm130, %v93, 0
    %v252 = vsel %vm130, %v94, 0
    %v255 = vsel %vm130, %v95, 0
    %v258 = vsel %vm130, %v96, 0
    %v261 = vsel %vm130, %v97, 0
    %v264 = vsel %vm130, %v98, 0
    %v267 = vsel %vm130, %v99, 0
    %v270 = vsel %vm130, %v100, 0
    %v273 = vsel %vm130, %v101, 0
    %v276 = vsel %vm130, %v102, 0
    %v279 = vsel %vm130, %v103, 0
    %v282 = vsel %vm130, %v104, 0
    %v285 = vsel %vm130, %v105, 0
    %v288 = vsel %vm130, %v106, 0
    %v291 = vsel %vm130, %v107, 0
    %v294 = vsel %vm130, %v108, 0
    %v297 = vsel %vm130, %v109, 0
    %v300 = vsel %vm130, %v110, 0
    %v303 = vsel %vm130, %v111, 0
    %v306 = vsel %vm130, %v112, 0
    %v309 = vsel %vm130, %v113, 0
    %v312 = vsel %vm130, %v114, 0
    %v315 = vsel %vm130, %v115, 0
    %v318 = vsel %vm130, %v116, 0
    %v321 = vsel %vm130, %v117, 0
    %323 = vmatprep.subr.mxu0 0.0
    %324 = vmatpush1.msra.mxu0 %v118
    %325 = vmatprep.subr.mxu0 0.0
    %326 = vmatpush1.msra.mxu0 %v119
    %327 = vmatprep.subr.mxu0 0.0
    %328 = vmatpush1.msra.mxu0 %v120
    %329 = vmatprep.subr.mxu0 0.0
    %330 = vmatpush1.msra.mxu0 %v121
    %331 = vmatprep.subr.mxu0 0.0
    %332 = vmatpush1.msra.mxu0 %v122
    %333 = vmatprep.subr.mxu0 0.0
    %334 = vmatpush1.msra.mxu0 0.0
    %335 = vmatprep.subr.mxu0 0.0
    %336 = vmatpush1.msra.mxu0 0.0
    %337 = vmatprep.subr.mxu0 0.0
    %338 = vmatpush1.msra.mxu0 0.0
    %339 = vmatprep.subr.mxu0 0.0
    %340 = vmatpush1.msra.mxu0 0.0
    %341 = vmatprep.subr.mxu0 0.0
    %342 = vmatpush1.msra.mxu0 0.0
    %343 = vmatprep.subr.mxu0 0.0
    %344 = vmatpush1.msra.mxu0 0.0
    %345 = vmatprep.subr.mxu0 0.0
    %346 = vmatpush1.msra.mxu0 0.0
    %347 = vmatprep.subr.mxu0 0.0
    %348 = vmatpush1.msra.mxu0 0.0
    %349 = vmatprep.subr.mxu0 0.0
    %350 = vmatpush1.msra.mxu0 0.0
    %351 = vmatprep.subr.mxu0 0.0
    %352 = vmatpush1.msra.mxu0 0.0
    %353 = vmatprep.subr.mxu0 0.0
    %354 = vmatpush1.msra.mxu0 0.0
    %355 = vmatprep.subr.mxu0 0.0
    %356 = vmatpush1.msra.mxu0 0.0
    %357 = vmatprep.subr.mxu0 0.0
    %358 = vmatpush1.msra.mxu0 0.0
    %359 = vmatprep.subr.mxu0 0.0
    %360 = vmatpush1.msra.mxu0 0.0
    %361 = vmatprep.subr.mxu0 0.0
    %362 = vmatpush1.msra.mxu0 0.0
    %363 = vmatprep.subr.mxu0 0.0
    %364 = vmatpush1.msra.mxu0 0.0
    %365 = vmatprep.subr.mxu0 0.0
    %366 = vmatpush1.msra.mxu0 0.0
    %367 = vmatprep.subr.mxu0 0.0
    %368 = vmatpush1.msra.mxu0 0.0
    %369 = vmatprep.subr.mxu0 0.0
    %370 = vmatpush1.msra.mxu0 0.0
    %371 = vmatprep.subr.mxu0 0.0
    %372 = vmatpush1.msra.mxu0 0.0
    %373 = vmatprep.subr.mxu0 0.0
    %374 = vmatpush1.msra.mxu0 0.0
    %375 = vmatprep.subr.mxu0 0.0
    %376 = vmatpush1.msra.mxu0 0.0
    %377 = vmatprep.subr.mxu0 0.0
    %378 = vmatpush1.msra.mxu0 0.0
    %379 = vmatprep.subr.mxu0 0.0
    %380 = vmatpush1.msra.mxu0 0.0
    %381 = vmatprep.subr.mxu0 0.0
    %382 = vmatpush1.msra.mxu0 0.0
    %383 = vmatprep.subr.mxu0 0.0
    %384 = vmatpush1.msra.mxu0 0.0
    %385 = vmatprep.subr.mxu0 0.0
    %386 = vmatpush1.msra.mxu0 0.0
    %387 = vmatprep.mubr.f32.mxu0 0.0
    %388 = vmatmul.mubr.f32.gmra.mrb[0].mxu0 %v132
    %v389 = vpop.f32.mrb[0].mxu0
    %v390 = vadd.f32 %v128, %v389
    %v391 = vpop.f32.mrb[0].mxu0
    %392 = vmatprep.mubr.f32.mxu0 0.0
    %393 = vmatmul.mubr.f32.gmra.mrb[0].mxu0 %v135
    %v394 = vpop.f32.mrb[0].mxu0
    %v395 = vadd.f32 %v128, %v394
    %v396 = vpop.f32.mrb[0].mxu0
    %397 = vmatprep.mubr.f32.mxu0 0.0
    %398 = vmatmul.mubr.f32.gmra.mrb[0].mxu0 %v138
    %v399 = vpop.f32.mrb[0].mxu0
    %v400 = vadd.f32 %v128, %v399
    %v401 = vpop.f32.mrb[0].mxu0
    %402 = vmatprep.mubr.f32.mxu0 0.0
    %403 = vmatmul.mubr.f32.gmra.mrb[0].mxu0 %v141
    %v404 = vpop.f32.mrb[0].mxu0
    %v405 = vadd.f32 %v128, %v404
    %v406 = vpop.f32.mrb[0].mxu0
    %407 = vmatprep.mubr.f32.mxu0 0.0
    %408 = vmatmul.mubr.f32.gmra.mrb[0].mxu0 %v144
    %v409 = vpop.f32.mrb[0].mxu0
    %v410 = vadd.f32 %v128, %v409
    %v411 = vpop.f32.mrb[0].mxu0
    %412 = vmatprep.mubr.f32.mxu0 0.0
    %413 = vmatmul.mubr.f32.gmra.mrb[0].mxu0 %v147
    %v414 = vpop.f32.mrb[0].mxu0
    %v415 = vadd.f32 %v128, %v414
    %v416 = vpop.f32.mrb[0].mxu0
    %417 = vmatprep.mubr.f32.mxu0 0.0
    %418 = vmatmul.mubr.f32.gmra.mrb[0].mxu0 %v150
    %v419 = vpop.f32.mrb[0].mxu0
    %v420 = vadd.f32 %v128, %v419
    %v421 = vpop.f32.mrb[0].mxu0
    %422 = vmatprep.mubr.f32.mxu0 0.0
    %423 = vmatmul.mubr.f32.gmra.mrb[0].mxu0 %v153
    %v424 = vpop.f32.mrb[0].mxu0
    %v425 = vadd.f32 %v128, %v424
    %v426 = vpop.f32.mrb[0].mxu0
    %427 = vmatprep.mubr.f32.mxu0 0.0
    %428 = vmatmul.mubr.f32.gmra.mrb[0].mxu0 %v156
    %v429 = vpop.f32.mrb[0].mxu0
    %v430 = vadd.f32 %v128, %v429
    %v431 = vpop.f32.mrb[0].mxu0
    %432 = vmatprep.mubr.f32.mxu0 0.0
    %433 = vmatmul.mubr.f32.gmra.mrb[0].mxu0 %v159
    %v434 = vpop.f32.mrb[0].mxu0
    %v435 = vadd.f32 %v128, %v434
    %v436 = vpop.f32.mrb[0].mxu0
    %437 = vmatprep.mubr.f32.mxu0 0.0
    %438 = vmatmul.mubr.f32.gmra.mrb[0].mxu0 %v162
    %v439 = vpop.f32.mrb[0].mxu0
    %v440 = vadd.f32 %v128, %v439
    %v441 = vpop.f32.mrb[0].mxu0
    %442 = vmatprep.mubr.f32.mxu0 0.0
    %443 = vmatmul.mubr.f32.gmra.mrb[0].mxu0 %v165
    %v444 = vpop.f32.mrb[0].mxu0
    %v445 = vadd.f32 %v128, %v444
    %v446 = vpop.f32.mrb[0].mxu0
    %447 = vmatprep.mubr.f32.mxu0 0.0
    %448 = vmatmul.mubr.f32.gmra.mrb[0].mxu0 %v168
    %v449 = vpop.f32.mrb[0].mxu0
    %v450 = vadd.f32 %v128, %v449
    %v451 = vpop.f32.mrb[0].mxu0
    %452 = vmatprep.mubr.f32.mxu0 0.0
    %453 = vmatmul.mubr.f32.gmra.mrb[0].mxu0 %v171
    %v454 = vpop.f32.mrb[0].mxu0
    %v455 = vadd.f32 %v128, %v454
    %v456 = vpop.f32.mrb[0].mxu0
    %457 = vmatprep.mubr.f32.mxu0 0.0
    %458 = vmatmul.mubr.f32.gmra.mrb[0].mxu0 %v174
    %v459 = vpop.f32.mrb[0].mxu0
    %v460 = vadd.f32 %v128, %v459
    %v461 = vpop.f32.mrb[0].mxu0
    %462 = vmatprep.mubr.f32.mxu0 0.0
    %463 = vmatmul.mubr.f32.gmra.mrb[0].mxu0 %v177
    %v464 = vpop.f32.mrb[0].mxu0
    %v465 = vadd.f32 %v128, %v464
    %v466 = vpop.f32.mrb[0].mxu0
    %467 = vmatprep.mubr.f32.mxu0 0.0
    %468 = vmatmul.mubr.f32.gmra.mrb[0].mxu0 %v180
    %v469 = vpop.f32.mrb[0].mxu0
    %v470 = vadd.f32 %v128, %v469
    %v471 = vpop.f32.mrb[0].mxu0
    %472 = vmatprep.mubr.f32.mxu0 0.0
    %473 = vmatmul.mubr.f32.gmra.mrb[0].mxu0 %v183
    %v474 = vpop.f32.mrb[0].mxu0
    %v475 = vadd.f32 %v128, %v474
    %v476 = vpop.f32.mrb[0].mxu0
    %477 = vmatprep.mubr.f32.mxu0 0.0
    %478 = vmatmul.mubr.f32.gmra.mrb[0].mxu0 %v186
    %v479 = vpop.f32.mrb[0].mxu0
    %v480 = vadd.f32 %v128, %v479
    %v481 = vpop.f32.mrb[0].mxu0
    %482 = vmatprep.mubr.f32.mxu0 0.0
    %483 = vmatmul.mubr.f32.gmra.mrb[0].mxu0 %v189
    %v484 = vpop.f32.mrb[0].mxu0
    %v485 = vadd.f32 %v128, %v484
    %v486 = vpop.f32.mrb[0].mxu0
    %487 = vmatprep.mubr.f32.mxu0 0.0
    %488 = vmatmul.mubr.f32.gmra.mrb[0].mxu0 %v192
    %v489 = vpop.f32.mrb[0].mxu0
    %v490 = vadd.f32 %v128, %v489
    %v491 = vpop.f32.mrb[0].mxu0
    %492 = vmatprep.mubr.f32.mxu0 0.0
    %493 = vmatmul.mubr.f32.gmra.mrb[0].mxu0 %v195
    %v494 = vpop.f32.mrb[0].mxu0
    %v495 = vadd.f32 %v128, %v494
    %v496 = vpop.f32.mrb[0].mxu0
    %497 = vmatprep.mubr.f32.mxu0 0.0
    %498 = vmatmul.mubr.f32.gmra.mrb[0].mxu0 %v198
    %v499 = vpop.f32.mrb[0].mxu0
    %v500 = vadd.f32 %v128, %v499
    %v501 = vpop.f32.mrb[0].mxu0
    %502 = vmatprep.mubr.f32.mxu0 0.0
    %503 = vmatmul.mubr.f32.gmra.mrb[0].mxu0 %v201
    %v504 = vpop.f32.mrb[0].mxu0
    %v505 = vadd.f32 %v128, %v504
    %v506 = vpop.f32.mrb[0].mxu0
    %507 = vmatprep.mubr.f32.mxu0 0.0
    %508 = vmatmul.mubr.f32.gmra.mrb[0].mxu0 %v204
    %v509 = vpop.f32.mrb[0].mxu0
    %v510 = vadd.f32 %v128, %v509
    %v511 = vpop.f32.mrb[0].mxu0
    %512 = vmatprep.mubr.f32.mxu0 0.0
    %513 = vmatmul.mubr.f32.gmra.mrb[0].mxu0 %v207
    %v514 = vpop.f32.mrb[0].mxu0
    %v515 = vadd.f32 %v128, %v514
    %v516 = vpop.f32.mrb[0].mxu0
    %517 = vmatprep.mubr.f32.mxu0 0.0
    %518 = vmatmul.mubr.f32.gmra.mrb[0].mxu0 %v210
    %v519 = vpop.f32.mrb[0].mxu0
    %v520 = vadd.f32 %v128, %v519
    %v521 = vpop.f32.mrb[0].mxu0
    %522 = vmatprep.mubr.f32.mxu0 0.0
    %523 = vmatmul.mubr.f32.gmra.mrb[0].mxu0 %v213
    %v524 = vpop.f32.mrb[0].mxu0
    %v525 = vadd.f32 %v128, %v524
    %v526 = vpop.f32.mrb[0].mxu0
    %527 = vmatprep.mubr.f32.mxu0 0.0
    %528 = vmatmul.mubr.f32.gmra.mrb[0].mxu0 %v216
    %v529 = vpop.f32.mrb[0].mxu0
    %v530 = vadd.f32 %v128, %v529
    %v531 = vpop.f32.mrb[0].mxu0
    %532 = vmatprep.mubr.f32.mxu0 0.0
    %533 = vmatmul.mubr.f32.gmra.mrb[0].mxu0 %v219
    %v534 = vpop.f32.mrb[0].mxu0
    %v535 = vadd.f32 %v128, %v534
    %v536 = vpop.f32.mrb[0].mxu0
    %537 = vmatprep.mubr.f32.mxu0 0.0
    %538 = vmatmul.mubr.f32.gmra.mrb[0].mxu0 %v222
    %v539 = vpop.f32.mrb[0].mxu0
    %v540 = vadd.f32 %v128, %v539
    %v541 = vpop.f32.mrb[0].mxu0
    %542 = vmatprep.mubr.f32.mxu0 0.0
    %543 = vmatmul.mubr.f32.gmra.mrb[0].mxu0 %v225
    %v544 = vpop.f32.mrb[0].mxu0
    %v545 = vadd.f32 %v128, %v544
    %v546 = vpop.f32.mrb[0].mxu0
    %547 = vmatprep.mubr.f32.mxu0 0.0
    %548 = vmatmul.mubr.f32.gmra.mrb[0].mxu0 %v228
    %v549 = vpop.f32.mrb[0].mxu0
    %v550 = vadd.f32 %v128, %v549
    %v551 = vpop.f32.mrb[0].mxu0
    %552 = vmatprep.mubr.f32.mxu0 0.0
    %553 = vmatmul.mubr.f32.gmra.mrb[0].mxu0 %v231
    %v554 = vpop.f32.mrb[0].mxu0
    %v555 = vadd.f32 %v128, %v554
    %v556 = vpop.f32.mrb[0].mxu0
    %557 = vmatprep.mubr.f32.mxu0 0.0
    %558 = vmatmul.mubr.f32.gmra.mrb[0].mxu0 %v234
    %v559 = vpop.f32.mrb[0].mxu0
    %v560 = vadd.f32 %v128, %v559
    %v561 = vpop.f32.mrb[0].mxu0
    %562 = vmatprep.mubr.f32.mxu0 0.0
    %563 = vmatmul.mubr.f32.gmra.mrb[0].mxu0 %v237
    %v564 = vpop.f32.mrb[0].mxu0
    %v565 = vadd.f32 %v128, %v564
    %v566 = vpop.f32.mrb[0].mxu0
    %567 = vmatprep.mubr.f32.mxu0 0.0
    %568 = vmatmul.mubr.f32.gmra.mrb[0].mxu0 %v240
    %v569 = vpop.f32.mrb[0].mxu0
    %v570 = vadd.f32 %v128, %v569
    %v571 = vpop.f32.mrb[0].mxu0
    %572 = vmatprep.mubr.f32.mxu0 0.0
    %573 = vmatmul.mubr.f32.gmra.mrb[0].mxu0 %v243
    %v574 = vpop.f32.mrb[0].mxu0
    %v575 = vadd.f32 %v128, %v574
    %v576 = vpop.f32.mrb[0].mxu0
    %577 = vmatprep.mubr.f32.mxu0 0.0
    %578 = vmatmul.mubr.f32.gmra.mrb[0].mxu0 %v246
    %v579 = vpop.f32.mrb[0].mxu0
    %v580 = vadd.f32 %v128, %v579
    %v581 = vpop.f32.mrb[0].mxu0
    %582 = vmatprep.mubr.f32.mxu0 0.0
    %583 = vmatmul.mubr.f32.gmra.mrb[0].mxu0 %v249
    %v584 = vpop.f32.mrb[0].mxu0
    %v585 = vadd.f32 %v128, %v584
    %v586 = vpop.f32.mrb[0].mxu0
    %587 = vmatprep.mubr.f32.mxu0 0.0
    %588 = vmatmul.mubr.f32.gmra.mrb[0].mxu0 %v252
    %v589 = vpop.f32.mrb[0].mxu0
    %v590 = vadd.f32 %v128, %v589
    %v591 = vpop.f32.mrb[0].mxu0
    %592 = vmatprep.mubr.f32.mxu0 0.0
    %593 = vmatmul.mubr.f32.gmra.mrb[0].mxu0 %v255
    %v594 = vpop.f32.mrb[0].mxu0
    %v595 = vadd.f32 %v128, %v594
    %v596 = vpop.f32.mrb[0].mxu0
    %597 = vmatprep.mubr.f32.mxu0 0.0
    %598 = vmatmul.mubr.f32.gmra.mrb[0].mxu0 %v258
    %v599 = vpop.f32.mrb[0].mxu0
    %v600 = vadd.f32 %v128, %v599
    %v601 = vpop.f32.mrb[0].mxu0
    %602 = vmatprep.mubr.f32.mxu0 0.0
    %603 = vmatmul.mubr.f32.gmra.mrb[0].mxu0 %v261
    %v604 = vpop.f32.mrb[0].mxu0
    %v605 = vadd.f32 %v128, %v604
    %v606 = vpop.f32.mrb[0].mxu0
    %607 = vmatprep.mubr.f32.mxu0 0.0
    %608 = vmatmul.mubr.f32.gmra.mrb[0].mxu0 %v264
    %v609 = vpop.f32.mrb[0].mxu0
    %v610 = vadd.f32 %v128, %v609
    %v611 = vpop.f32.mrb[0].mxu0
    %612 = vmatprep.mubr.f32.mxu0 0.0
    %613 = vmatmul.mubr.f32.gmra.mrb[0].mxu0 %v267
    %v614 = vpop.f32.mrb[0].mxu0
    %v615 = vadd.f32 %v128, %v614
    %v616 = vpop.f32.mrb[0].mxu0
    %617 = vmatprep.mubr.f32.mxu0 0.0
    %618 = vmatmul.mubr.f32.gmra.mrb[0].mxu0 %v270
    %v619 = vpop.f32.mrb[0].mxu0
    %v620 = vadd.f32 %v128, %v619
    %v621 = vpop.f32.mrb[0].mxu0
    %622 = vmatprep.mubr.f32.mxu0 0.0
    %623 = vmatmul.mubr.f32.gmra.mrb[0].mxu0 %v273
    %v624 = vpop.f32.mrb[0].mxu0
    %v625 = vadd.f32 %v128, %v624
    %v626 = vpop.f32.mrb[0].mxu0
    %627 = vmatprep.mubr.f32.mxu0 0.0
    %628 = vmatmul.mubr.f32.gmra.mrb[0].mxu0 %v276
    %v629 = vpop.f32.mrb[0].mxu0
    %v630 = vadd.f32 %v128, %v629
    %v631 = vpop.f32.mrb[0].mxu0
    %632 = vmatprep.mubr.f32.mxu0 0.0
    %633 = vmatmul.mubr.f32.gmra.mrb[0].mxu0 %v279
    %v634 = vpop.f32.mrb[0].mxu0
    %v635 = vadd.f32 %v128, %v634
    %v636 = vpop.f32.mrb[0].mxu0
    %637 = vmatprep.mubr.f32.mxu0 0.0
    %638 = vmatmul.mubr.f32.gmra.mrb[0].mxu0 %v282
    %v639 = vpop.f32.mrb[0].mxu0
    %v640 = vadd.f32 %v128, %v639
    %v641 = vpop.f32.mrb[0].mxu0
    %642 = vmatprep.mubr.f32.mxu0 0.0
    %643 = vmatmul.mubr.f32.gmra.mrb[0].mxu0 %v285
    %v644 = vpop.f32.mrb[0].mxu0
    %v645 = vadd.f32 %v128, %v644
    %v646 = vpop.f32.mrb[0].mxu0
    %647 = vmatprep.mubr.f32.mxu0 0.0
    %648 = vmatmul.mubr.f32.gmra.mrb[0].mxu0 %v288
    %v649 = vpop.f32.mrb[0].mxu0
    %v650 = vadd.f32 %v128, %v649
    %v651 = vpop.f32.mrb[0].mxu0
    %652 = vmatprep.mubr.f32.mxu0 0.0
    %653 = vmatmul.mubr.f32.gmra.mrb[0].mxu0 %v291
    %v654 = vpop.f32.mrb[0].mxu0
    %v655 = vadd.f32 %v128, %v654
    %v656 = vpop.f32.mrb[0].mxu0
    %657 = vmatprep.mubr.f32.mxu0 0.0
    %658 = vmatmul.mubr.f32.gmra.mrb[0].mxu0 %v294
    %v659 = vpop.f32.mrb[0].mxu0
    %v660 = vadd.f32 %v128, %v659
    %v661 = vpop.f32.mrb[0].mxu0
    %662 = vmatprep.mubr.f32.mxu0 0.0
    %663 = vmatmul.mubr.f32.gmra.mrb[0].mxu0 %v297
    %v664 = vpop.f32.mrb[0].mxu0
    %v665 = vadd.f32 %v128, %v664
    %v666 = vpop.f32.mrb[0].mxu0
    %667 = vmatprep.mubr.f32.mxu0 0.0
    %668 = vmatmul.mubr.f32.gmra.mrb[0].mxu0 %v300
    %v669 = vpop.f32.mrb[0].mxu0
    %v670 = vadd.f32 %v128, %v669
    %v671 = vpop.f32.mrb[0].mxu0
    %672 = vmatprep.mubr.f32.mxu0 0.0
    %673 = vmatmul.mubr.f32.gmra.mrb[0].mxu0 %v303
    %v674 = vpop.f32.mrb[0].mxu0
    %v675 = vadd.f32 %v128, %v674
    %v676 = vpop.f32.mrb[0].mxu0
    %677 = vmatprep.mubr.f32.mxu0 0.0
    %678 = vmatmul.mubr.f32.gmra.mrb[0].mxu0 %v306
    %v679 = vpop.f32.mrb[0].mxu0
    %v680 = vadd.f32 %v128, %v679
    %v681 = vpop.f32.mrb[0].mxu0
    %682 = vmatprep.mubr.f32.mxu0 0.0
    %683 = vmatmul.mubr.f32.gmra.mrb[0].mxu0 %v309
    %v684 = vpop.f32.mrb[0].mxu0
    %v685 = vadd.f32 %v128, %v684
    %v686 = vpop.f32.mrb[0].mxu0
    %687 = vmatprep.mubr.f32.mxu0 0.0
    %688 = vmatmul.mubr.f32.gmra.mrb[0].mxu0 %v312
    %v689 = vpop.f32.mrb[0].mxu0
    %v690 = vadd.f32 %v128, %v689
    %v691 = vpop.f32.mrb[0].mxu0
    %692 = vmatprep.mubr.f32.mxu0 0.0
    %693 = vmatmul.mubr.f32.gmra.mrb[0].mxu0 %v315
    %v694 = vpop.f32.mrb[0].mxu0
    %v695 = vadd.f32 %v128, %v694
    %v696 = vpop.f32.mrb[0].mxu0
    %697 = vmatprep.mubr.f32.mxu0 0.0
    %698 = vmatmul.mubr.f32.gmra.mrb[0].mxu0 %v318
    %v699 = vpop.f32.mrb[0].mxu0
    %v700 = vadd.f32 %v128, %v699
    %v701 = vpop.f32.mrb[0].mxu0
    %702 = vmatprep.mubr.f32.mxu0 0.0
    %703 = vmatmul.mubr.f32.gmra.mrb[0].mxu0 %v321
    %v704 = vpop.f32.mrb[0].mxu0
    %v705 = vadd.f32 %v128, %v704
    %v706 = vpop.f32.mrb[0].mxu0
    %707 = vdwg.mxu0
    %v708 = vmax.f32 %v390, 0.0
    %v709 = vmax.f32 %v395, 0.0
    %v710 = vmax.f32 %v400, 0.0
    %v711 = vmax.f32 %v405, 0.0
    %v712 = vmax.f32 %v410, 0.0
    %v713 = vmax.f32 %v415, 0.0
    %v714 = vmax.f32 %v420, 0.0
    %v715 = vmax.f32 %v425, 0.0
    %v716 = vmax.f32 %v430, 0.0
    %v717 = vmax.f32 %v435, 0.0
    %v718 = vmax.f32 %v440, 0.0
    %v719 = vmax.f32 %v445, 0.0
    %v720 = vmax.f32 %v450, 0.0
    %v721 = vmax.f32 %v455, 0.0
    %v722 = vmax.f32 %v460, 0.0
    %v723 = vmax.f32 %v465, 0.0
    %v724 = vmax.f32 %v470, 0.0
    %v725 = vmax.f32 %v475, 0.0
    %v726 = vmax.f32 %v480, 0.0
    %v727 = vmax.f32 %v485, 0.0
    %v728 = vmax.f32 %v490, 0.0
    %v729 = vmax.f32 %v495, 0.0
    %v730 = vmax.f32 %v500, 0.0
    %v731 = vmax.f32 %v505, 0.0
    %v732 = vmax.f32 %v510, 0.0
    %v733 = vmax.f32 %v515, 0.0
    %v734 = vmax.f32 %v520, 0.0
    %v735 = vmax.f32 %v525, 0.0
    %v736 = vmax.f32 %v530, 0.0
    %v737 = vmax.f32 %v535, 0.0
    %v738 = vmax.f32 %v540, 0.0
    %v739 = vmax.f32 %v545, 0.0
    %v740 = vmax.f32 %v550, 0.0
    %v741 = vmax.f32 %v555, 0.0
    %v742 = vmax.f32 %v560, 0.0
    %v743 = vmax.f32 %v565, 0.0
    %v744 = vmax.f32 %v570, 0.0
    %v745 = vmax.f32 %v575, 0.0
    %v746 = vmax.f32 %v580, 0.0
    %v747 = vmax.f32 %v585, 0.0
    %v748 = vmax.f32 %v590, 0.0
    %v749 = vmax.f32 %v595, 0.0
    %v750 = vmax.f32 %v600, 0.0
    %v751 = vmax.f32 %v605, 0.0
    %v752 = vmax.f32 %v610, 0.0
    %v753 = vmax.f32 %v615, 0.0
    %v754 = vmax.f32 %v620, 0.0
    %v755 = vmax.f32 %v625, 0.0
    %v756 = vmax.f32 %v630, 0.0
    %v757 = vmax.f32 %v635, 0.0
    %v758 = vmax.f32 %v640, 0.0
    %v759 = vmax.f32 %v645, 0.0
    %v760 = vmax.f32 %v650, 0.0
    %v761 = vmax.f32 %v655, 0.0
    %v762 = vmax.f32 %v660, 0.0
    %v763 = vmax.f32 %v665, 0.0
    %v764 = vmax.f32 %v670, 0.0
    %v765 = vmax.f32 %v675, 0.0
    %v766 = vmax.f32 %v680, 0.0
    %v767 = vmax.f32 %v685, 0.0
    %v768 = vmax.f32 %v690, 0.0
    %v769 = vmax.f32 %v695, 0.0
    %v770 = vmax.f32 %v700, 0.0
    %v771 = vmax.f32 %v705, 0.0
    %772 = vst [vmem:[#allocation8] sm:$0xff] %v708
    %773 = vst [vmem:[#allocation8 + $0x8] sm:$0xff] %v709
    %774 = vst [vmem:[#allocation8 + $0x10] sm:$0xff] %v710
    %775 = vst [vmem:[#allocation8 + $0x18] sm:$0xff] %v711
    %776 = vst [vmem:[#allocation8 + $0x20] sm:$0xff] %v712
    %777 = vst [vmem:[#allocation8 + $0x28] sm:$0xff] %v713
    %778 = vst [vmem:[#allocation8 + $0x30] sm:$0xff] %v714
    %779 = vst [vmem:[#allocation8 + $0x38] sm:$0xff] %v715
    %780 = vst [vmem:[#allocation8 + $0x40] sm:$0xff] %v716
    %781 = vst [vmem:[#allocation8 + $0x48] sm:$0xff] %v717
    %782 = vst [vmem:[#allocation8 + $0x50] sm:$0xff] %v718
    %783 = vst [vmem:[#allocation8 + $0x58] sm:$0xff] %v719
    %784 = vst [vmem:[#allocation8 + $0x60] sm:$0xff] %v720
    %785 = vst [vmem:[#allocation8 + $0x68] sm:$0xff] %v721
    %786 = vst [vmem:[#allocation8 + $0x70] sm:$0xff] %v722
    %787 = vst [vmem:[#allocation8 + $0x78] sm:$0xff] %v723
    %788 = vst [vmem:[#allocation8 + $0x80] sm:$0xff] %v724
    %789 = vst [vmem:[#allocation8 + $0x88] sm:$0xff] %v725
    %790 = vst [vmem:[#allocation8 + $0x90] sm:$0xff] %v726
    %791 = vst [vmem:[#allocation8 + $0x98] sm:$0xff] %v727
    %792 = vst [vmem:[#allocation8 + $0xa0] sm:$0xff] %v728
    %793 = vst [vmem:[#allocation8 + $0xa8] sm:$0xff] %v729
    %794 = vst [vmem:[#allocation8 + $0xb0] sm:$0xff] %v730
    %795 = vst [vmem:[#allocation8 + $0xb8] sm:$0xff] %v731
    %796 = vst [vmem:[#allocation8 + $0xc0] sm:$0xff] %v732
    %797 = vst [vmem:[#allocation8 + $0xc8] sm:$0xff] %v733
    %798 = vst [vmem:[#allocation8 + $0xd0] sm:$0xff] %v734
    %799 = vst [vmem:[#allocation8 + $0xd8] sm:$0xff] %v735
    %800 = vst [vmem:[#allocation8 + $0xe0] sm:$0xff] %v736
    %801 = vst [vmem:[#allocation8 + $0xe8] sm:$0xff] %v737
    %802 = vst [vmem:[#allocation8 + $0xf0] sm:$0xff] %v738
    %803 = vst [vmem:[#allocation8 + $0xf8] sm:$0xff] %v739
    %804 = vst [vmem:[#allocation8 + $0x100] sm:$0xff] %v740
    %805 = vst [vmem:[#allocation8 + $0x108] sm:$0xff] %v741
    %806 = vst [vmem:[#allocation8 + $0x110] sm:$0xff] %v742
    %807 = vst [vmem:[#allocation8 + $0x118] sm:$0xff] %v743
    %808 = vst [vmem:[#allocation8 + $0x120] sm:$0xff] %v744
    %809 = vst [vmem:[#allocation8 + $0x128] sm:$0xff] %v745
    %810 = vst [vmem:[#allocation8 + $0x130] sm:$0xff] %v746
    %811 = vst [vmem:[#allocation8 + $0x138] sm:$0xff] %v747
    %812 = vst [vmem:[#allocation8 + $0x140] sm:$0xff] %v748
    %813 = vst [vmem:[#allocation8 + $0x148] sm:$0xff] %v749
    %814 = vst [vmem:[#allocation8 + $0x150] sm:$0xff] %v750
    %815 = vst [vmem:[#allocation8 + $0x158] sm:$0xff] %v751
    %816 = vst [vmem:[#allocation8 + $0x160] sm:$0xff] %v752
    %817 = vst [vmem:[#allocation8 + $0x168] sm:$0xff] %v753
    %818 = vst [vmem:[#allocation8 + $0x170] sm:$0xff] %v754
    %819 = vst [vmem:[#allocation8 + $0x178] sm:$0xff] %v755
    %820 = vst [vmem:[#allocation8 + $0x180] sm:$0xff] %v756
    %821 = vst [vmem:[#allocation8 + $0x188] sm:$0xff] %v757
    %822 = vst [vmem:[#allocation8 + $0x190] sm:$0xff] %v758
    %823 = vst [vmem:[#allocation8 + $0x198] sm:$0xff] %v759
    %824 = vst [vmem:[#allocation8 + $0x1a0] sm:$0xff] %v760
    %825 = vst [vmem:[#allocation8 + $0x1a8] sm:$0xff] %v761
    %826 = vst [vmem:[#allocation8 + $0x1b0] sm:$0xff] %v762
    %827 = vst [vmem:[#allocation8 + $0x1b8] sm:$0xff] %v763
    %828 = vst [vmem:[#allocation8 + $0x1c0] sm:$0xff] %v764
    %829 = vst [vmem:[#allocation8 + $0x1c8] sm:$0xff] %v765
    %830 = vst [vmem:[#allocation8 + $0x1d0] sm:$0xff] %v766
    %831 = vst [vmem:[#allocation8 + $0x1d8] sm:$0xff] %v767
    %832 = vst [vmem:[#allocation8 + $0x1e0] sm:$0xff] %v768
    %833 = vst [vmem:[#allocation8 + $0x1e8] sm:$0xff] %v769
    %834 = vst [vmem:[#allocation8 + $0x1f0] sm:$0xff] %v770
    %835 = vst [vmem:[#allocation8 + $0x1f8] sm:$0xff] %v771
    // Predicated region
    $region26: #{tpu_custom_call.1} parent=1 // pred_check
      _
    $region27: #{tpu_custom_call.1} parent=1 // pred_check_branch
      %837 = sbr.rel (0) target = $region29
    $region28: #{tpu_custom_call.1} parent=1 // pred_region
      %s839 = ssub.s32 8192, 8192
      %840 = vsyncadd [#allocation4], %s839
      %s841 = sshll.u32 [#allocation8], 4
      %s842 = int_to_ptr.vmem [resolvable:$true] %s841
      %847 = dma.vmem_to_hbm [thread:$0]  %s842, 8192, %s3, [#allocation4], 128, 128, 8
    $region29: #{tpu_custom_call.1} parent=1 // pred_fallthru
      _
    // Predicated region
    $region30: #{tpu_custom_call.1} parent=1 // pred_check
      _
    $region31: #{tpu_custom_call.1} parent=1 // pred_check_branch
      %849 = sbr.rel (0) target = $region33
    $region32: #{tpu_custom_call.1} parent=1 // pred_region
      %850 = dma.done [#allocation4], 8192
    $region33: #{tpu_custom_call.1} parent=1 // pred_fallthru
      _
    %851 = vsyncpa [#allocation3], 1
    %852 = vsyncpa [#allocation6], 1
    %853 = vsyncpa [#allocation4], 1

</llo_original>
